<compile_context>
chip_gen: v5e
topology: v5e:2x2
jax: 0.10.0
libtpu: 0.0.40
codegen_flags: <defaults>
</compile_context>

<pallas_src>
import jax
import jax.numpy as jnp
from jax.experimental import pallas as pl
from jax.experimental.pallas import tpu as pltpu


def _round_up(x, m):
    return (x + m - 1) // m * m


def _fused_kernel(xs_ref, bw_ref, psum_ref, pool_ref, wc_ref, b_ref,
                  pooled_ref, logits_ref):
    """One batch tile (TB images) per grid step.

    xs_ref:     (TB*H, Dc)       bf16  dy-stacked padded rows, lane-padded to Dc (128-mult)
    bw_ref:     (Dc, W*Cf)       bf16  stacked banded conv weights (constant block)
    psum_ref:   (TB, TB*H)       f32   block-diagonal per-image row-sum matrix
    pool_ref:   (W*Cf, Cf_pad)   f32   collapses W column groups + applies 1/(H*W) scale
    wc_ref:     (Cf_pad, NC_pad) f32   classifier weight, pre-transposed + zero-padded
    b_ref:      (1, NC_pad)      f32   classifier bias, zero-padded
    pooled_ref: (TB, Cf_pad)     f32   (lane-dense)
    logits_ref: (TB, NC_pad)     f32   (lane-dense)
    """
    # Conv (single MXU matmul, f32 accumulation) + ReLU tail of the synthetic `features`.
    feat = jnp.maximum(
        jnp.dot(xs_ref[...], bw_ref[...], preferred_element_type=jnp.float32), 0.0)

    # Global average pool: per-image row-sum (block-diagonal matmul, no reshapes) then a
    # tiny matmul that collapses the W groups and applies the 1/(H*W) scale.
    rowsum = jnp.dot(psum_ref[...], feat, preferred_element_type=jnp.float32)   # (TB, W*Cf)
    pooled = jnp.dot(rowsum, pool_ref[...], preferred_element_type=jnp.float32)  # (TB, Cf_pad)
    pooled_ref[...] = pooled

    # Classifier head (weight already transposed in glue — no in-kernel .T).
    logits_ref[...] = (jnp.dot(pooled, wc_ref[...],
                               preferred_element_type=jnp.float32) + b_ref[...])


def transferred_network_m(x_nchw, conv_w, wc, b):
    """x_nchw: (N, Cin, H, W) f32; conv_w: (Cfeat, Cin, K, K) PyTorch OIHW layout;
    wc: (num_classes, Cfeat); b: (num_classes,).
    Returns (pooled (N, Cfeat), logits (N, num_classes))."""
    N, Cin, H, W = x_nchw.shape
    Cfeat, _, K, _ = conv_w.shape
    NC = wc.shape[0]
    pad = K // 2
    Hp, Wp = H + 2 * pad, W + 2 * pad
    WpC = Wp * Cin
    WCf = W * Cfeat
    Dc = _round_up(K * WpC, 128)           # padded contraction depth (full MXU passes)
    Cf_pad = _round_up(Cfeat, 128)         # lane-dense pooled output
    NC_pad = _round_up(NC, 128)            # lane-dense logits output

    # Batch tile: TB images per grid step (TB*H lhs rows per MXU pass).
    TB = N if N <= 8 else 8                # multiple of 8 whenever grid > 1
    N_pad = _round_up(N, TB)
    steps = N_pad // TB

    # ---------------- glue: layout plumbing (tiny, runs under jit) ----------------
    x_nhwc = jnp.transpose(x_nchw, (0, 2, 3, 1)).astype(jnp.float32)
    xp = jnp.pad(x_nhwc, ((0, N_pad - N), (pad, pad), (pad, pad), (0, 0)))
    x2 = xp.reshape(N_pad, Hp, WpC)
    # dy-stacked rows: xs[n*H + i, dy*WpC + (jx*Cin + c)] = xp[n, i+dy, jx, c]
    xs = jnp.concatenate([x2[:, dy:dy + H, :] for dy in range(K)], axis=-1)
    xs = xs.reshape(N_pad * H, K * WpC)
    xs = jnp.pad(xs, ((0, 0), (0, Dc - K * WpC))).astype(jnp.bfloat16)

    # Banded conv weights: bw[dy, jx*Cin + c, j*Cfeat + o] = conv_w[o, c, dy, jx - j]
    # for 0 <= jx - j < K, else 0; then stacked over dy along the contraction dim.
    wt = jnp.transpose(conv_w, (2, 3, 1, 0)).astype(jnp.float32)      # (K, K, Cin, Cfeat)
    jxx = jnp.arange(Wp)[:, None]
    jj = jnp.arange(W)[None, :]
    dxm = jxx - jj                                                    # (Wp, W)
    band = ((dxm >= 0) & (dxm < K)).astype(jnp.float32)
    dx_idx = jnp.clip(dxm, 0, K - 1)
    bwk = wt[:, dx_idx] * band[None, :, :, None, None]                # (K, Wp, W, Cin, Cfeat)
    bwk = jnp.transpose(bwk, (0, 1, 3, 2, 4)).reshape(K, WpC, WCf)
    bw = bwk.reshape(K * WpC, WCf)
    bw = jnp.pad(bw, ((0, Dc - K * WpC), (0, 0))).astype(jnp.bfloat16)

    # Block-diagonal per-image row-sum matrix, average-pool matrix, classifier constants.
    psum = (jnp.arange(TB)[:, None] == (jnp.arange(TB * H)[None, :] // H)).astype(jnp.float32)
    pool_mat = jnp.tile(jnp.eye(Cfeat, Cf_pad, dtype=jnp.float32), (W, 1)) / float(H * W)
    wc_t = jnp.zeros((Cf_pad, NC_pad), jnp.float32).at[:Cfeat, :NC].set(
        wc.T.astype(jnp.float32))
    b_pad = jnp.zeros((1, NC_pad), jnp.float32).at[0, :NC].set(b.astype(jnp.float32))

    flops = steps * (2 * TB * H * Dc * WCf + 2 * TB * TB * H * WCf
                     + 2 * TB * WCf * Cf_pad + 2 * TB * Cf_pad * NC_pad)
    bytes_accessed = int(xs.size * 2 + bw.size * 2 + psum.size * 4 + pool_mat.size * 4
                         + wc_t.size * 4 + b_pad.size * 4
                         + N_pad * (Cf_pad + NC_pad) * 4)

    pooled_p, logits_p = pl.pallas_call(
        _fused_kernel,
        out_shape=(
            jax.ShapeDtypeStruct((N_pad, Cf_pad), jnp.float32),
            jax.ShapeDtypeStruct((N_pad, NC_pad), jnp.float32),
        ),
        grid=(steps,),
        in_specs=[
            pl.BlockSpec((TB * H, Dc), lambda n: (n, 0)),     # per-tile rows, double-buffered
            pl.BlockSpec((Dc, WCf), lambda n: (0, 0)),        # constant blocks stay resident
            pl.BlockSpec((TB, TB * H), lambda n: (0, 0)),
            pl.BlockSpec((WCf, Cf_pad), lambda n: (0, 0)),
            pl.BlockSpec((Cf_pad, NC_pad), lambda n: (0, 0)),
            pl.BlockSpec((1, NC_pad), lambda n: (0, 0)),
        ],
        out_specs=(
            pl.BlockSpec((TB, Cf_pad), lambda n: (n, 0)),
            pl.BlockSpec((TB, NC_pad), lambda n: (n, 0)),
        ),
        compiler_params=pltpu.CompilerParams(
            dimension_semantics=("parallel",),                # batch tiles independent
            vmem_limit_bytes=32 * 1024 * 1024,                # fits v5e/v6e/v7x scoped VMEM
        ),
        cost_estimate=pl.CostEstimate(flops=int(flops), transcendentals=0,
                                      bytes_accessed=bytes_accessed),
    )(xs, bw, psum, pool_mat, wc_t, b_pad)

    pooled = pooled_p[:N, :Cfeat]
    logits = logits_p[:N, :NC]
    return pooled, logits


def _reference(x_nchw, conv_w, wc, b):
    """Pure-JAX f32 reference: conv(3x3, same, no bias) + ReLU -> mean([2,3]) -> Linear."""
    feat = jax.lax.conv_general_dilated(
        x_nchw.astype(jnp.float32), conv_w.astype(jnp.float32),
        window_strides=(1, 1), padding="SAME",
        dimension_numbers=("NCHW", "OIHW", "NCHW"))
    feat = jnp.maximum(feat, 0.0)
    pooled = feat.mean(axis=(2, 3))
    logits = pooled @ wc.T + b
    return pooled, logits


if __name__ == "__main__":
    key = jax.random.PRNGKey(0)
    k_x, k_conv, k_w, k_b = jax.random.split(key, 4)

    # Small shapes consistent with the module's forward.
    N, Cin, H, W = 2, 4, 16, 16           # input image batch (NCHW)
    K = 3                                  # synthetic "features" conv kernel
    Cfeat = 32                             # pretrained_model.classifier[1].in_features
    num_classes = 10

    x = jax.random.normal(k_x, (N, Cin, H, W), dtype=jnp.float32)
    conv_w = 0.1 * jax.random.normal(k_conv, (Cfeat, Cin, K, K), dtype=jnp.float32)  # OIHW
    wc = 0.1 * jax.random.normal(k_w, (num_classes, Cfeat), dtype=jnp.float32)
    b = 0.1 * jax.random.normal(k_b, (num_classes,), dtype=jnp.float32)

    pooled, logits = jax.jit(transferred_network_m)(x, conv_w, wc, b)
    jax.block_until_ready((pooled, logits))

    # Validate against the pure-f32 reference (kernel uses bf16 inputs, f32 accumulation).
    pooled_ref, logits_ref = _reference(x, conv_w, wc, b)
    assert pooled.shape == (N, Cfeat) and logits.shape == (N, num_classes)
    assert jnp.allclose(pooled, pooled_ref, rtol=2e-2, atol=2e-2), \
        float(jnp.max(jnp.abs(pooled - pooled_ref)))
    assert jnp.allclose(logits, logits_ref, rtol=2e-2, atol=2e-2), \
        float(jnp.max(jnp.abs(logits - logits_ref)))

    print("KERNEL_OK")
</pallas_src>

<mosaic_0001>
module attributes {stable_mosaic.version = 11 : i64} {
  func.func @_fused_kernel(%arg0: i32, %arg1: memref<32x256xbf16, #tpu.memory_space<vmem>>, %arg2: memref<256x512xbf16, #tpu.memory_space<vmem>>, %arg3: memref<2x32xf32, #tpu.memory_space<vmem>>, %arg4: memref<512x128xf32, #tpu.memory_space<vmem>>, %arg5: memref<128x128xf32, #tpu.memory_space<vmem>>, %arg6: memref<1x128xf32, #tpu.memory_space<vmem>>, %arg7: memref<2x128xf32, #tpu.memory_space<vmem>>, %arg8: memref<2x128xf32, #tpu.memory_space<vmem>>) attributes {dimension_semantics = [#tpu.dimension_semantics<parallel>], iteration_bounds = array<i64: 1>, scalar_prefetch = 0 : i64, scratch_operands = 0 : i64, tpu.core_type = #tpu.core_type<tc>, window_params = [{transform_indices = @transform_0, window_bounds = array<i64: 32, 256>}, {pipeline_mode = #tpu.pipeline_mode<synchronous>, transform_indices = @transform_1, window_bounds = array<i64: 256, 512>}, {pipeline_mode = #tpu.pipeline_mode<synchronous>, transform_indices = @transform_2, window_bounds = array<i64: 2, 32>}, {pipeline_mode = #tpu.pipeline_mode<synchronous>, transform_indices = @transform_3, window_bounds = array<i64: 512, 128>}, {pipeline_mode = #tpu.pipeline_mode<synchronous>, transform_indices = @transform_4, window_bounds = array<i64: 128, 128>}, {pipeline_mode = #tpu.pipeline_mode<synchronous>, transform_indices = @transform_5, window_bounds = array<i64: 1, 128>}, {transform_indices = @transform_6, window_bounds = array<i64: 2, 128>}, {transform_indices = @transform_7, window_bounds = array<i64: 2, 128>}]} {
    %c0 = arith.constant 0 : index
    %c0_0 = arith.constant 0 : index
    %0 = vector.load %arg1[%c0, %c0_0] : memref<32x256xbf16, #tpu.memory_space<vmem>>, vector<32x256xbf16>
    %c0_1 = arith.constant 0 : index
    %c0_2 = arith.constant 0 : index
    %1 = vector.load %arg2[%c0_1, %c0_2] : memref<256x512xbf16, #tpu.memory_space<vmem>>, vector<256x512xbf16>
    %cst = arith.constant dense<0.000000e+00> : vector<32x512xf32>
    %2 = tpu.matmul %0, %1, %cst {dimension_numbers = #tpu.dot_dimension_numbers<[1], [0], [0], [1], [0, 0, 1, 1], [], []>} : vector<32x256xbf16>, vector<256x512xbf16>, vector<32x512xf32> -> vector<32x512xf32>
    %cst_3 = arith.constant 0.000000e+00 : f32
    %3 = vector.broadcast %cst_3 : f32 to vector<32x512xf32>
    %4 = arith.maximumf %2, %3 : vector<32x512xf32>
    %c0_4 = arith.constant 0 : index
    %c0_5 = arith.constant 0 : index
    %5 = vector.load %arg3[%c0_4, %c0_5] : memref<2x32xf32, #tpu.memory_space<vmem>>, vector<2x32xf32>
    %cst_6 = arith.constant dense<0.000000e+00> : vector<2x512xf32>
    %6 = tpu.matmul %5, %4, %cst_6 {dimension_numbers = #tpu.dot_dimension_numbers<[1], [0], [0], [1], [0, 0, 1, 1], [], []>} : vector<2x32xf32>, vector<32x512xf32>, vector<2x512xf32> -> vector<2x512xf32>
    %c0_7 = arith.constant 0 : index
    %c0_8 = arith.constant 0 : index
    %7 = vector.load %arg4[%c0_7, %c0_8] : memref<512x128xf32, #tpu.memory_space<vmem>>, vector<512x128xf32>
    %cst_9 = arith.constant dense<0.000000e+00> : vector<2x128xf32>
    %8 = tpu.matmul %6, %7, %cst_9 {dimension_numbers = #tpu.dot_dimension_numbers<[1], [0], [0], [1], [0, 0, 1, 1], [], []>} : vector<2x512xf32>, vector<512x128xf32>, vector<2x128xf32> -> vector<2x128xf32>
    %c0_10 = arith.constant 0 : index
    %c0_11 = arith.constant 0 : index
    %9 = vector.load %arg7[%c0_10, %c0_11] : memref<2x128xf32, #tpu.memory_space<vmem>>, vector<2x128xf32>
    tpu.vector_store %arg7[%c0_10, %c0_11], %8 {strides = array<i32>} : memref<2x128xf32, #tpu.memory_space<vmem>>, vector<2x128xf32>,
    %c0_12 = arith.constant 0 : index
    %c0_13 = arith.constant 0 : index
    %10 = vector.load %arg5[%c0_12, %c0_13] : memref<128x128xf32, #tpu.memory_space<vmem>>, vector<128x128xf32>
    %cst_14 = arith.constant dense<0.000000e+00> : vector<2x128xf32>
    %11 = tpu.matmul %8, %10, %cst_14 {dimension_numbers = #tpu.dot_dimension_numbers<[1], [0], [0], [1], [0, 0, 1, 1], [], []>} : vector<2x128xf32>, vector<128x128xf32>, vector<2x128xf32> -> vector<2x128xf32>
    %c0_15 = arith.constant 0 : index
    %c0_16 = arith.constant 0 : index
    %12 = vector.load %arg6[%c0_15, %c0_16] : memref<1x128xf32, #tpu.memory_space<vmem>>, vector<1x128xf32>
    %13 = vector.broadcast %12 : vector<1x128xf32> to vector<2x128xf32>
    %14 = arith.addf %11, %13 : vector<2x128xf32>
    %c0_17 = arith.constant 0 : index
    %c0_18 = arith.constant 0 : index
    %15 = vector.load %arg8[%c0_17, %c0_18] : memref<2x128xf32, #tpu.memory_space<vmem>>, vector<2x128xf32>
    tpu.vector_store %arg8[%c0_17, %c0_18], %14 {strides = array<i32>} : memref<2x128xf32, #tpu.memory_space<vmem>>, vector<2x128xf32>,
    return
  }
  func.func @transform_0(%arg0: i32) -> (i32, i32) {
    %c0_i32 = arith.constant 0 : i32
    %c0_i32_0 = arith.constant 0 : i32
    return %arg0, %c0_i32 : i32, i32
  }
  func.func @transform_1(%arg0: i32) -> (i32, i32) {
    %c0_i32 = arith.constant 0 : i32
    %c0_i32_0 = arith.constant 0 : i32
    %c0_i32_1 = arith.constant 0 : i32
    return %c0_i32, %c0_i32_0 : i32, i32
  }
  func.func @transform_2(%arg0: i32) -> (i32, i32) {
    %c0_i32 = arith.constant 0 : i32
    %c0_i32_0 = arith.constant 0 : i32
    %c0_i32_1 = arith.constant 0 : i32
    return %c0_i32, %c0_i32_0 : i32, i32
  }
  func.func @transform_3(%arg0: i32) -> (i32, i32) {
    %c0_i32 = arith.constant 0 : i32
    %c0_i32_0 = arith.constant 0 : i32
    %c0_i32_1 = arith.constant 0 : i32
    return %c0_i32, %c0_i32_0 : i32, i32
  }
  func.func @transform_4(%arg0: i32) -> (i32, i32) {
    %c0_i32 = arith.constant 0 : i32
    %c0_i32_0 = arith.constant 0 : i32
    %c0_i32_1 = arith.constant 0 : i32
    return %c0_i32, %c0_i32_0 : i32, i32
  }
  func.func @transform_5(%arg0: i32) -> (i32, i32) {
    %c0_i32 = arith.constant 0 : i32
    %c0_i32_0 = arith.constant 0 : i32
    %c0_i32_1 = arith.constant 0 : i32
    return %c0_i32, %c0_i32_0 : i32, i32
  }
  func.func @transform_6(%arg0: i32) -> (i32, i32) {
    %c0_i32 = arith.constant 0 : i32
    %c0_i32_0 = arith.constant 0 : i32
    return %arg0, %c0_i32 : i32, i32
  }
  func.func @transform_7(%arg0: i32) -> (i32, i32) {
    %c0_i32 = arith.constant 0 : i32
    %c0_i32_0 = arith.constant 0 : i32
    return %arg0, %c0_i32 : i32, i32
  }
}

</mosaic_0001>

<llo_original>
// kernel: transferred_network_m.1
$region0: #{transferred_network_m.1}
  #allocation0 [shape = 'u32[]', space=smem, size = 0x4, offset = 0x4, fixed_abs, tag = 'smem constant byte address 0x4 - core index']
  #allocation1 [shape = 'u32[72,128]{1,0:T(1,128)}', space=vmem, size = 0x9000, scoped, tag = 'internal scratch']
  %s0 = inlined_call_operand.vmem [shape: bf16[32,256], index: 0, kind: input, shape index: {}]
  %s1 = inlined_call_operand.vmem [shape: bf16[256,512], index: 1, kind: input, shape index: {}]
  %s2 = inlined_call_operand.vmem [shape: f32[2,32], index: 2, kind: input, shape index: {}]
  %s3 = inlined_call_operand.vmem [shape: f32[512,128], index: 3, kind: input, shape index: {}]
  %s4 = inlined_call_operand.vmem [shape: f32[128,128], index: 4, kind: input, shape index: {}]
  %s5 = inlined_call_operand.vmem [shape: f32[1,128], index: 5, kind: input, shape index: {}]
  %s6 = inlined_call_operand.hbm [shape: f32[2,128], index: 6, kind: output, shape index: {0}]
  %s7 = inlined_call_operand.hbm [shape: f32[2,128], index: 7, kind: output, shape index: {1}]
  %8 = xla_tuple %s6, %s7
  %s9 = sld [smem:[#allocation0]]
  $region42: #{transferred_network_m.1} parent=0
    _
  %s11 = ssub.s32 1, %s9
  %s12 = scalar_select 0, %s11, %s9
  $region1: #{transferred_network_m.1} parent=0
    #allocation2 [shape = 'u8[1024]{0}', space=vmem, size = 0x400, scoped, tag = 'output window, operand 0, single buffered']
    #allocation3 [shape = 's32[1]{0}', space=sflag, size = 0x4, scoped, tag = 'scoped memory for transferred_network_m.1']
    #allocation4 [shape = 'u8[1024]{0}', space=vmem, size = 0x400, scoped, tag = 'output window, operand 1, single buffered']
    #allocation5 [shape = 's32[1]{0}', space=sflag, size = 0x4, scoped, tag = 'scoped memory for transferred_network_m.1']
    %13 = vsyncpa [#allocation3], 0
    %14 = vsyncpa [#allocation5], 0
    // Predicated region
    $region2: #{transferred_network_m.1} parent=1 // pred_check
      _
    $region3: #{transferred_network_m.1} parent=1 // pred_check_branch
      %16 = sbr.rel (0) target = $region5
    $region4: #{transferred_network_m.1} parent=1 // pred_region
      _
    $region5: #{transferred_network_m.1} parent=1 // pred_fallthru
      _
    // Predicated region
    $region6: #{transferred_network_m.1} parent=1 // pred_check
      _
    $region7: #{transferred_network_m.1} parent=1 // pred_check_branch
      %18 = sbr.rel (0) target = $region9
    $region8: #{transferred_network_m.1} parent=1 // pred_region
      _
    $region9: #{transferred_network_m.1} parent=1 // pred_fallthru
      _
    // Predicated region
    $region10: #{transferred_network_m.1} parent=1 // pred_check
      _
    $region11: #{transferred_network_m.1} parent=1 // pred_check_branch
      %20 = sbr.rel (0) target = $region13
    $region12: #{transferred_network_m.1} parent=1 // pred_region
      _
    $region13: #{transferred_network_m.1} parent=1 // pred_fallthru
      _
    // Predicated region
    $region14: #{transferred_network_m.1} parent=1 // pred_check
      _
    $region15: #{transferred_network_m.1} parent=1 // pred_check_branch
      %22 = sbr.rel (0) target = $region17
    $region16: #{transferred_network_m.1} parent=1 // pred_region
      _
    $region17: #{transferred_network_m.1} parent=1 // pred_fallthru
      _
    // Predicated region
    $region18: #{transferred_network_m.1} parent=1 // pred_check
      _
    $region19: #{transferred_network_m.1} parent=1 // pred_check_branch
      %24 = sbr.rel (0) target = $region21
    $region20: #{transferred_network_m.1} parent=1 // pred_region
      _
    $region21: #{transferred_network_m.1} parent=1 // pred_fallthru
      _
    // Predicated region
    $region22: #{transferred_network_m.1} parent=1 // pred_check
      _
    $region23: #{transferred_network_m.1} parent=1 // pred_check_branch
      %26 = sbr.rel (0) target = $region25
    $region24: #{transferred_network_m.1} parent=1 // pred_region
      _
    $region25: #{transferred_network_m.1} parent=1 // pred_fallthru
      _
    %v27 = vld [vmem:[%s0] sm:$0xff]
    %v28 = vld [vmem:[%s0 + $0x8] sm:$0xff]
    %v29 = vld [vmem:[%s0 + $0x10] sm:$0xff]
    %v30 = vld [vmem:[%s0 + $0x18] sm:$0xff]
    %v31 = vld [vmem:[%s1] sm:$0xff]
    %v32 = vld [vmem:[%s1 + $0x8] sm:$0xff]
    %v33 = vld [vmem:[%s1 + $0x10] sm:$0xff]
    %v34 = vld [vmem:[%s1 + $0x18] sm:$0xff]
    %v35 = vld [vmem:[%s1 + $0x20] sm:$0xff]
    %v36 = vld [vmem:[%s1 + $0x28] sm:$0xff]
    %v37 = vld [vmem:[%s1 + $0x30] sm:$0xff]
    %v38 = vld [vmem:[%s1 + $0x38] sm:$0xff]
    %v39 = vld [vmem:[%s1 + $0x40] sm:$0xff]
    %v40 = vld [vmem:[%s1 + $0x48] sm:$0xff]
    %v41 = vld [vmem:[%s1 + $0x50] sm:$0xff]
    %v42 = vld [vmem:[%s1 + $0x58] sm:$0xff]
    %v43 = vld [vmem:[%s1 + $0x60] sm:$0xff]
    %v44 = vld [vmem:[%s1 + $0x68] sm:$0xff]
    %v45 = vld [vmem:[%s1 + $0x70] sm:$0xff]
    %v46 = vld [vmem:[%s1 + $0x78] sm:$0xff]
    %v47 = vld [vmem:[%s1 + $0x80] sm:$0xff]
    %v48 = vld [vmem:[%s1 + $0x88] sm:$0xff]
    %v49 = vld [vmem:[%s1 + $0x90] sm:$0xff]
    %v50 = vld [vmem:[%s1 + $0x98] sm:$0xff]
    %v51 = vld [vmem:[%s1 + $0xa0] sm:$0xff]
    %v52 = vld [vmem:[%s1 + $0xa8] sm:$0xff]
    %v53 = vld [vmem:[%s1 + $0xb0] sm:$0xff]
    %v54 = vld [vmem:[%s1 + $0xb8] sm:$0xff]
    %v55 = vld [vmem:[%s1 + $0xc0] sm:$0xff]
    %v56 = vld [vmem:[%s1 + $0xc8] sm:$0xff]
    %v57 = vld [vmem:[%s1 + $0xd0] sm:$0xff]
    %v58 = vld [vmem:[%s1 + $0xd8] sm:$0xff]
    %v59 = vld [vmem:[%s1 + $0xe0] sm:$0xff]
    %v60 = vld [vmem:[%s1 + $0xe8] sm:$0xff]
    %v61 = vld [vmem:[%s1 + $0xf0] sm:$0xff]
    %v62 = vld [vmem:[%s1 + $0xf8] sm:$0xff]
    %v63 = vld [vmem:[%s1 + $0x100] sm:$0xff]
    %v64 = vld [vmem:[%s1 + $0x108] sm:$0xff]
    %v65 = vld [vmem:[%s1 + $0x110] sm:$0xff]
    %v66 = vld [vmem:[%s1 + $0x118] sm:$0xff]
    %v67 = vld [vmem:[%s1 + $0x120] sm:$0xff]
    %v68 = vld [vmem:[%s1 + $0x128] sm:$0xff]
    %v69 = vld [vmem:[%s1 + $0x130] sm:$0xff]
    %v70 = vld [vmem:[%s1 + $0x138] sm:$0xff]
    %v71 = vld [vmem:[%s1 + $0x140] sm:$0xff]
    %v72 = vld [vmem:[%s1 + $0x148] sm:$0xff]
    %v73 = vld [vmem:[%s1 + $0x150] sm:$0xff]
    %v74 = vld [vmem:[%s1 + $0x158] sm:$0xff]
    %v75 = vld [vmem:[%s1 + $0x160] sm:$0xff]
    %v76 = vld [vmem:[%s1 + $0x168] sm:$0xff]
    %v77 = vld [vmem:[%s1 + $0x170] sm:$0xff]
    %v78 = vld [vmem:[%s1 + $0x178] sm:$0xff]
    %v79 = vld [vmem:[%s1 + $0x180] sm:$0xff]
    %v80 = vld [vmem:[%s1 + $0x188] sm:$0xff]
    %v81 = vld [vmem:[%s1 + $0x190] sm:$0xff]
    %v82 = vld [vmem:[%s1 + $0x198] sm:$0xff]
    %v83 = vld [vmem:[%s1 + $0x1a0] sm:$0xff]
    %v84 = vld [vmem:[%s1 + $0x1a8] sm:$0xff]
    %v85 = vld [vmem:[%s1 + $0x1b0] sm:$0xff]
    %v86 = vld [vmem:[%s1 + $0x1b8] sm:$0xff]
    %v87 = vld [vmem:[%s1 + $0x1c0] sm:$0xff]
    %v88 = vld [vmem:[%s1 + $0x1c8] sm:$0xff]
    %v89 = vld [vmem:[%s1 + $0x1d0] sm:$0xff]
    %v90 = vld [vmem:[%s1 + $0x1d8] sm:$0xff]
    %v91 = vld [vmem:[%s1 + $0x1e0] sm:$0xff]
    %v92 = vld [vmem:[%s1 + $0x1e8] sm:$0xff]
    %v93 = vld [vmem:[%s1 + $0x1f0] sm:$0xff]
    %v94 = vld [vmem:[%s1 + $0x1f8] sm:$0xff]
    %v99 = vunpack.c.l.b16 %v27
    %v100 = vunpack.c.h.b16 %v27
    %v101 = vunpack.c.l.b16 %v28
    %v102 = vunpack.c.h.b16 %v28
    %v103 = vunpack.c.l.b16 %v29
    %v104 = vunpack.c.h.b16 %v29
    %v105 = vunpack.c.l.b16 %v30
    %v106 = vunpack.c.h.b16 %v30
    %v107 = vpack.c.b16 %v101, %v99
    %v108 = vpack.c.b16 %v102, %v100
    %v109 = vpack.c.b16 %v105, %v103
    %v110 = vpack.c.b16 %v106, %v104
    %v179 = vunpack.c.l.b16 %v31
    %v180 = vunpack.c.h.b16 %v31
    %v181 = vunpack.c.l.b16 %v32
    %v182 = vunpack.c.h.b16 %v32
    %v183 = vunpack.c.l.b16 %v33
    %v184 = vunpack.c.h.b16 %v33
    %v185 = vunpack.c.l.b16 %v34
    %v186 = vunpack.c.h.b16 %v34
    %v187 = vunpack.c.l.b16 %v35
    %v188 = vunpack.c.h.b16 %v35
    %v189 = vunpack.c.l.b16 %v36
    %v190 = vunpack.c.h.b16 %v36
    %v191 = vunpack.c.l.b16 %v37
    %v192 = vunpack.c.h.b16 %v37
    %v193 = vunpack.c.l.b16 %v38
    %v194 = vunpack.c.h.b16 %v38
    %v195 = vunpack.c.l.b16 %v39
    %v196 = vunpack.c.h.b16 %v39
    %v197 = vunpack.c.l.b16 %v40
    %v198 = vunpack.c.h.b16 %v40
    %v199 = vunpack.c.l.b16 %v41
    %v200 = vunpack.c.h.b16 %v41
    %v201 = vunpack.c.l.b16 %v42
    %v202 = vunpack.c.h.b16 %v42
    %v203 = vunpack.c.l.b16 %v43
    %v204 = vunpack.c.h.b16 %v43
    %v205 = vunpack.c.l.b16 %v44
    %v206 = vunpack.c.h.b16 %v44
    %v207 = vunpack.c.l.b16 %v45
    %v208 = vunpack.c.h.b16 %v45
    %v209 = vunpack.c.l.b16 %v46
    %v210 = vunpack.c.h.b16 %v46
    %v211 = vunpack.c.l.b16 %v47
    %v212 = vunpack.c.h.b16 %v47
    %v213 = vunpack.c.l.b16 %v48
    %v214 = vunpack.c.h.b16 %v48
    %v215 = vunpack.c.l.b16 %v49
    %v216 = vunpack.c.h.b16 %v49
    %v217 = vunpack.c.l.b16 %v50
    %v218 = vunpack.c.h.b16 %v50
    %v219 = vunpack.c.l.b16 %v51
    %v220 = vunpack.c.h.b16 %v51
    %v221 = vunpack.c.l.b16 %v52
    %v222 = vunpack.c.h.b16 %v52
    %v223 = vunpack.c.l.b16 %v53
    %v224 = vunpack.c.h.b16 %v53
    %v225 = vunpack.c.l.b16 %v54
    %v226 = vunpack.c.h.b16 %v54
    %v227 = vunpack.c.l.b16 %v55
    %v228 = vunpack.c.h.b16 %v55
    %v229 = vunpack.c.l.b16 %v56
    %v230 = vunpack.c.h.b16 %v56
    %v231 = vunpack.c.l.b16 %v57
    %v232 = vunpack.c.h.b16 %v57
    %v233 = vunpack.c.l.b16 %v58
    %v234 = vunpack.c.h.b16 %v58
    %v235 = vunpack.c.l.b16 %v59
    %v236 = vunpack.c.h.b16 %v59
    %v237 = vunpack.c.l.b16 %v60
    %v238 = vunpack.c.h.b16 %v60
    %v239 = vunpack.c.l.b16 %v61
    %v240 = vunpack.c.h.b16 %v61
    %v241 = vunpack.c.l.b16 %v62
    %v242 = vunpack.c.h.b16 %v62
    %v243 = vunpack.c.l.b16 %v63
    %v244 = vunpack.c.h.b16 %v63
    %v245 = vunpack.c.l.b16 %v64
    %v246 = vunpack.c.h.b16 %v64
    %v247 = vunpack.c.l.b16 %v65
    %v248 = vunpack.c.h.b16 %v65
    %v249 = vunpack.c.l.b16 %v66
    %v250 = vunpack.c.h.b16 %v66
    %v251 = vunpack.c.l.b16 %v67
    %v252 = vunpack.c.h.b16 %v67
    %v253 = vunpack.c.l.b16 %v68
    %v254 = vunpack.c.h.b16 %v68
    %v255 = vunpack.c.l.b16 %v69
    %v256 = vunpack.c.h.b16 %v69
    %v257 = vunpack.c.l.b16 %v70
    %v258 = vunpack.c.h.b16 %v70
    %v259 = vunpack.c.l.b16 %v71
    %v260 = vunpack.c.h.b16 %v71
    %v261 = vunpack.c.l.b16 %v72
    %v262 = vunpack.c.h.b16 %v72
    %v263 = vunpack.c.l.b16 %v73
    %v264 = vunpack.c.h.b16 %v73
    %v265 = vunpack.c.l.b16 %v74
    %v266 = vunpack.c.h.b16 %v74
    %v267 = vunpack.c.l.b16 %v75
    %v268 = vunpack.c.h.b16 %v75
    %v269 = vunpack.c.l.b16 %v76
    %v270 = vunpack.c.h.b16 %v76
    %v271 = vunpack.c.l.b16 %v77
    %v272 = vunpack.c.h.b16 %v77
    %v273 = vunpack.c.l.b16 %v78
    %v274 = vunpack.c.h.b16 %v78
    %v275 = vunpack.c.l.b16 %v79
    %v276 = vunpack.c.h.b16 %v79
    %v277 = vunpack.c.l.b16 %v80
    %v278 = vunpack.c.h.b16 %v80
    %v279 = vunpack.c.l.b16 %v81
    %v280 = vunpack.c.h.b16 %v81
    %v281 = vunpack.c.l.b16 %v82
    %v282 = vunpack.c.h.b16 %v82
    %v283 = vunpack.c.l.b16 %v83
    %v284 = vunpack.c.h.b16 %v83
    %v285 = vunpack.c.l.b16 %v84
    %v286 = vunpack.c.h.b16 %v84
    %v287 = vunpack.c.l.b16 %v85
    %v288 = vunpack.c.h.b16 %v85
    %v289 = vunpack.c.l.b16 %v86
    %v290 = vunpack.c.h.b16 %v86
    %v291 = vunpack.c.l.b16 %v87
    %v292 = vunpack.c.h.b16 %v87
    %v293 = vunpack.c.l.b16 %v88
    %v294 = vunpack.c.h.b16 %v88
    %v295 = vunpack.c.l.b16 %v89
    %v296 = vunpack.c.h.b16 %v89
    %v297 = vunpack.c.l.b16 %v90
    %v298 = vunpack.c.h.b16 %v90
    %v299 = vunpack.c.l.b16 %v91
    %v300 = vunpack.c.h.b16 %v91
    %v301 = vunpack.c.l.b16 %v92
    %v302 = vunpack.c.h.b16 %v92
    %v303 = vunpack.c.l.b16 %v93
    %v304 = vunpack.c.h.b16 %v93
    %v305 = vunpack.c.l.b16 %v94
    %v306 = vunpack.c.h.b16 %v94
    %v307 = vpack.c.b16 %v183, %v179
    %v308 = vpack.c.b16 %v184, %v180
    %v309 = vpack.c.b16 %v185, %v181
    %v310 = vpack.c.b16 %v186, %v182
    %v311 = vpack.c.b16 %v191, %v187
    %v312 = vpack.c.b16 %v192, %v188
    %v313 = vpack.c.b16 %v193, %v189
    %v314 = vpack.c.b16 %v194, %v190
    %v315 = vpack.c.b16 %v199, %v195
    %v316 = vpack.c.b16 %v200, %v196
    %v317 = vpack.c.b16 %v201, %v197
    %v318 = vpack.c.b16 %v202, %v198
    %v319 = vpack.c.b16 %v207, %v203
    %v320 = vpack.c.b16 %v208, %v204
    %v321 = vpack.c.b16 %v209, %v205
    %v322 = vpack.c.b16 %v210, %v206
    %v323 = vpack.c.b16 %v215, %v211
    %v324 = vpack.c.b16 %v216, %v212
    %v325 = vpack.c.b16 %v217, %v213
    %v326 = vpack.c.b16 %v218, %v214
    %v327 = vpack.c.b16 %v223, %v219
    %v328 = vpack.c.b16 %v224, %v220
    %v329 = vpack.c.b16 %v225, %v221
    %v330 = vpack.c.b16 %v226, %v222
    %v331 = vpack.c.b16 %v231, %v227
    %v332 = vpack.c.b16 %v232, %v228
    %v333 = vpack.c.b16 %v233, %v229
    %v334 = vpack.c.b16 %v234, %v230
    %v335 = vpack.c.b16 %v239, %v235
    %v336 = vpack.c.b16 %v240, %v236
    %v337 = vpack.c.b16 %v241, %v237
    %v338 = vpack.c.b16 %v242, %v238
    %v339 = vpack.c.b16 %v247, %v243
    %v340 = vpack.c.b16 %v248, %v244
    %v341 = vpack.c.b16 %v249, %v245
    %v342 = vpack.c.b16 %v250, %v246
    %v343 = vpack.c.b16 %v255, %v251
    %v344 = vpack.c.b16 %v256, %v252
    %v345 = vpack.c.b16 %v257, %v253
    %v346 = vpack.c.b16 %v258, %v254
    %v347 = vpack.c.b16 %v263, %v259
    %v348 = vpack.c.b16 %v264, %v260
    %v349 = vpack.c.b16 %v265, %v261
    %v350 = vpack.c.b16 %v266, %v262
    %v351 = vpack.c.b16 %v271, %v267
    %v352 = vpack.c.b16 %v272, %v268
    %v353 = vpack.c.b16 %v273, %v269
    %v354 = vpack.c.b16 %v274, %v270
    %v355 = vpack.c.b16 %v279, %v275
    %v356 = vpack.c.b16 %v280, %v276
    %v357 = vpack.c.b16 %v281, %v277
    %v358 = vpack.c.b16 %v282, %v278
    %v359 = vpack.c.b16 %v287, %v283
    %v360 = vpack.c.b16 %v288, %v284
    %v361 = vpack.c.b16 %v289, %v285
    %v362 = vpack.c.b16 %v290, %v286
    %v363 = vpack.c.b16 %v295, %v291
    %v364 = vpack.c.b16 %v296, %v292
    %v365 = vpack.c.b16 %v297, %v293
    %v366 = vpack.c.b16 %v298, %v294
    %v367 = vpack.c.b16 %v303, %v299
    %v368 = vpack.c.b16 %v304, %v300
    %v369 = vpack.c.b16 %v305, %v301
    %v370 = vpack.c.b16 %v306, %v302
    %435 = vmatpush.bf16.msra.mxu0 %v335
    %436 = vmatpush.bf16.msra.mxu0 %v331
    %437 = vmatpush.bf16.msra.mxu0 %v327
    %438 = vmatpush.bf16.msra.mxu0 %v323
    %439 = vmatpush.bf16.msra.mxu0 %v319
    %440 = vmatpush.bf16.msra.mxu0 %v315
    %441 = vmatpush.bf16.msra.mxu0 %v311
    %442 = vmatpush.bf16.msra.mxu0 %v307
    %443 = vmatmul.bf16.gmra.mxu0 %v107
    %v444 = vpop.f32.mrf.mxu0
    %v445 = vadd.f32 0.0, %v444
    %v446 = vpop.f32.mrf.mxu0
    %v447 = vadd.f32 0.0, %v446
    %448 = vmatmul.bf16.gmra.mxu0 %v109
    %v449 = vpop.f32.mrf.mxu0
    %v450 = vadd.f32 0.0, %v449
    %v451 = vpop.f32.mrf.mxu0
    %v452 = vadd.f32 0.0, %v451
    %453 = vdwg.mxu0
    %454 = vmatpush.bf16.msra.mxu0 %v367
    %455 = vmatpush.bf16.msra.mxu0 %v363
    %456 = vmatpush.bf16.msra.mxu0 %v359
    %457 = vmatpush.bf16.msra.mxu0 %v355
    %458 = vmatpush.bf16.msra.mxu0 %v351
    %459 = vmatpush.bf16.msra.mxu0 %v347
    %460 = vmatpush.bf16.msra.mxu0 %v343
    %461 = vmatpush.bf16.msra.mxu0 %v339
    %462 = vmatmul.bf16.gmra.mxu0 %v108
    %v463 = vpop.f32.mrf.mxu0
    %v464 = vadd.f32 %v445, %v463
    %v465 = vpop.f32.mrf.mxu0
    %v466 = vadd.f32 %v447, %v465
    %467 = vmatmul.bf16.gmra.mxu0 %v110
    %v468 = vpop.f32.mrf.mxu0
    %v469 = vadd.f32 %v450, %v468
    %v470 = vpop.f32.mrf.mxu0
    %v471 = vadd.f32 %v452, %v470
    %472 = vdwg.mxu0
    %473 = vmatpush.bf16.msra.mxu0 %v336
    %474 = vmatpush.bf16.msra.mxu0 %v332
    %475 = vmatpush.bf16.msra.mxu0 %v328
    %476 = vmatpush.bf16.msra.mxu0 %v324
    %477 = vmatpush.bf16.msra.mxu0 %v320
    %478 = vmatpush.bf16.msra.mxu0 %v316
    %479 = vmatpush.bf16.msra.mxu0 %v312
    %480 = vmatpush.bf16.msra.mxu0 %v308
    %481 = vmatmul.bf16.gmra.mxu0 %v107
    %v482 = vpop.f32.mrf.mxu0
    %v483 = vadd.f32 0.0, %v482
    %v484 = vpop.f32.mrf.mxu0
    %v485 = vadd.f32 0.0, %v484
    %486 = vmatmul.bf16.gmra.mxu0 %v109
    %v487 = vpop.f32.mrf.mxu0
    %v488 = vadd.f32 0.0, %v487
    %v489 = vpop.f32.mrf.mxu0
    %v490 = vadd.f32 0.0, %v489
    %491 = vdwg.mxu0
    %492 = vmatpush.bf16.msra.mxu0 %v368
    %493 = vmatpush.bf16.msra.mxu0 %v364
    %494 = vmatpush.bf16.msra.mxu0 %v360
    %495 = vmatpush.bf16.msra.mxu0 %v356
    %496 = vmatpush.bf16.msra.mxu0 %v352
    %497 = vmatpush.bf16.msra.mxu0 %v348
    %498 = vmatpush.bf16.msra.mxu0 %v344
    %499 = vmatpush.bf16.msra.mxu0 %v340
    %500 = vmatmul.bf16.gmra.mxu0 %v108
    %v501 = vpop.f32.mrf.mxu0
    %v502 = vadd.f32 %v483, %v501
    %v503 = vpop.f32.mrf.mxu0
    %v504 = vadd.f32 %v485, %v503
    %505 = vmatmul.bf16.gmra.mxu0 %v110
    %v506 = vpop.f32.mrf.mxu0
    %v507 = vadd.f32 %v488, %v506
    %v508 = vpop.f32.mrf.mxu0
    %v509 = vadd.f32 %v490, %v508
    %510 = vdwg.mxu0
    %511 = vmatpush.bf16.msra.mxu0 %v337
    %512 = vmatpush.bf16.msra.mxu0 %v333
    %513 = vmatpush.bf16.msra.mxu0 %v329
    %514 = vmatpush.bf16.msra.mxu0 %v325
    %515 = vmatpush.bf16.msra.mxu0 %v321
    %516 = vmatpush.bf16.msra.mxu0 %v317
    %517 = vmatpush.bf16.msra.mxu0 %v313
    %518 = vmatpush.bf16.msra.mxu0 %v309
    %519 = vmatmul.bf16.gmra.mxu0 %v107
    %v520 = vpop.f32.mrf.mxu0
    %v521 = vadd.f32 0.0, %v520
    %v522 = vpop.f32.mrf.mxu0
    %v523 = vadd.f32 0.0, %v522
    %524 = vmatmul.bf16.gmra.mxu0 %v109
    %v525 = vpop.f32.mrf.mxu0
    %v526 = vadd.f32 0.0, %v525
    %v527 = vpop.f32.mrf.mxu0
    %v528 = vadd.f32 0.0, %v527
    %529 = vdwg.mxu0
    %530 = vmatpush.bf16.msra.mxu0 %v369
    %531 = vmatpush.bf16.msra.mxu0 %v365
    %532 = vmatpush.bf16.msra.mxu0 %v361
    %533 = vmatpush.bf16.msra.mxu0 %v357
    %534 = vmatpush.bf16.msra.mxu0 %v353
    %535 = vmatpush.bf16.msra.mxu0 %v349
    %536 = vmatpush.bf16.msra.mxu0 %v345
    %537 = vmatpush.bf16.msra.mxu0 %v341
    %538 = vmatmul.bf16.gmra.mxu0 %v108
    %v539 = vpop.f32.mrf.mxu0
    %v540 = vadd.f32 %v521, %v539
    %v541 = vpop.f32.mrf.mxu0
    %v542 = vadd.f32 %v523, %v541
    %543 = vmatmul.bf16.gmra.mxu0 %v110
    %v544 = vpop.f32.mrf.mxu0
    %v545 = vadd.f32 %v526, %v544
    %v546 = vpop.f32.mrf.mxu0
    %v547 = vadd.f32 %v528, %v546
    %548 = vdwg.mxu0
    %549 = vmatpush.bf16.msra.mxu0 %v338
    %550 = vmatpush.bf16.msra.mxu0 %v334
    %551 = vmatpush.bf16.msra.mxu0 %v330
    %552 = vmatpush.bf16.msra.mxu0 %v326
    %553 = vmatpush.bf16.msra.mxu0 %v322
    %554 = vmatpush.bf16.msra.mxu0 %v318
    %555 = vmatpush.bf16.msra.mxu0 %v314
    %556 = vmatpush.bf16.msra.mxu0 %v310
    %557 = vmatmul.bf16.gmra.mxu0 %v107
    %v558 = vpop.f32.mrf.mxu0
    %v559 = vadd.f32 0.0, %v558
    %v560 = vpop.f32.mrf.mxu0
    %v561 = vadd.f32 0.0, %v560
    %562 = vmatmul.bf16.gmra.mxu0 %v109
    %v563 = vpop.f32.mrf.mxu0
    %v564 = vadd.f32 0.0, %v563
    %v565 = vpop.f32.mrf.mxu0
    %v566 = vadd.f32 0.0, %v565
    %567 = vdwg.mxu0
    %568 = vmatpush.bf16.msra.mxu0 %v370
    %569 = vmatpush.bf16.msra.mxu0 %v366
    %570 = vmatpush.bf16.msra.mxu0 %v362
    %571 = vmatpush.bf16.msra.mxu0 %v358
    %572 = vmatpush.bf16.msra.mxu0 %v354
    %573 = vmatpush.bf16.msra.mxu0 %v350
    %574 = vmatpush.bf16.msra.mxu0 %v346
    %575 = vmatpush.bf16.msra.mxu0 %v342
    %576 = vmatmul.bf16.gmra.mxu0 %v108
    %v577 = vpop.f32.mrf.mxu0
    %v578 = vadd.f32 %v559, %v577
    %v579 = vpop.f32.mrf.mxu0
    %v580 = vadd.f32 %v561, %v579
    %581 = vmatmul.bf16.gmra.mxu0 %v110
    %v582 = vpop.f32.mrf.mxu0
    %v583 = vadd.f32 %v564, %v582
    %v584 = vpop.f32.mrf.mxu0
    %v585 = vadd.f32 %v566, %v584
    %586 = vdwg.mxu0
    %v587 = vmax.f32 %v464, 0.0
    %v588 = vmax.f32 %v502, 0.0
    %v589 = vmax.f32 %v540, 0.0
    %v590 = vmax.f32 %v578, 0.0
    %v591 = vmax.f32 %v466, 0.0
    %v592 = vmax.f32 %v504, 0.0
    %v593 = vmax.f32 %v542, 0.0
    %v594 = vmax.f32 %v580, 0.0
    %v595 = vmax.f32 %v469, 0.0
    %v596 = vmax.f32 %v507, 0.0
    %v597 = vmax.f32 %v545, 0.0
    %v598 = vmax.f32 %v583, 0.0
    %v599 = vmax.f32 %v471, 0.0
    %v600 = vmax.f32 %v509, 0.0
    %v601 = vmax.f32 %v547, 0.0
    %v602 = vmax.f32 %v585, 0.0
    %v603 = vld [vmem:[%s2] sm:$0x3]
    %vm604 = vcmask 261120
    %v606 = vsel %vm604, %v603, 0
    %608 = vmatpush.msra.mxu0 0.0
    %609 = vmatpush.msra.mxu0 0.0
    %610 = vmatpush.msra.mxu0 0.0
    %611 = vmatpush.msra.mxu0 0.0
    %612 = vmatpush.msra.mxu0 0.0
    %613 = vmatpush.msra.mxu0 0.0
    %614 = vmatpush.msra.mxu0 0.0
    %615 = vmatpush.msra.mxu0 0.0
    %616 = vmatpush.msra.mxu0 0.0
    %617 = vmatpush.msra.mxu0 0.0
    %618 = vmatpush.msra.mxu0 0.0
    %619 = vmatpush.msra.mxu0 0.0
    %620 = vmatpush.msra.mxu0 %v599
    %621 = vmatpush.msra.mxu0 %v595
    %622 = vmatpush.msra.mxu0 %v591
    %623 = vmatpush.msra.mxu0 %v587
    %624 = vmatmul.f32.gmra.mxu0 %v606
    %v625 = vpop.f32.mrf.mxu0
    %v626 = vadd.f32 0.0, %v625
    %627 = vdwg.mxu0
    %628 = vmatpush.msra.mxu0 0.0
    %629 = vmatpush.msra.mxu0 0.0
    %630 = vmatpush.msra.mxu0 0.0
    %631 = vmatpush.msra.mxu0 0.0
    %632 = vmatpush.msra.mxu0 0.0
    %633 = vmatpush.msra.mxu0 0.0
    %634 = vmatpush.msra.mxu0 0.0
    %635 = vmatpush.msra.mxu0 0.0
    %636 = vmatpush.msra.mxu0 0.0
    %637 = vmatpush.msra.mxu0 0.0
    %638 = vmatpush.msra.mxu0 0.0
    %639 = vmatpush.msra.mxu0 0.0
    %640 = vmatpush.msra.mxu0 %v600
    %641 = vmatpush.msra.mxu0 %v596
    %642 = vmatpush.msra.mxu0 %v592
    %643 = vmatpush.msra.mxu0 %v588
    %644 = vmatmul.f32.gmra.mxu0 %v606
    %v645 = vpop.f32.mrf.mxu0
    %v646 = vadd.f32 0.0, %v645
    %647 = vdwg.mxu0
    %648 = vmatpush.msra.mxu0 0.0
    %649 = vmatpush.msra.mxu0 0.0
    %650 = vmatpush.msra.mxu0 0.0
    %651 = vmatpush.msra.mxu0 0.0
    %652 = vmatpush.msra.mxu0 0.0
    %653 = vmatpush.msra.mxu0 0.0
    %654 = vmatpush.msra.mxu0 0.0
    %655 = vmatpush.msra.mxu0 0.0
    %656 = vmatpush.msra.mxu0 0.0
    %657 = vmatpush.msra.mxu0 0.0
    %658 = vmatpush.msra.mxu0 0.0
    %659 = vmatpush.msra.mxu0 0.0
    %660 = vmatpush.msra.mxu0 %v601
    %661 = vmatpush.msra.mxu0 %v597
    %662 = vmatpush.msra.mxu0 %v593
    %663 = vmatpush.msra.mxu0 %v589
    %664 = vmatmul.f32.gmra.mxu0 %v606
    %v665 = vpop.f32.mrf.mxu0
    %v666 = vadd.f32 0.0, %v665
    %667 = vdwg.mxu0
    %668 = vmatpush.msra.mxu0 0.0
    %669 = vmatpush.msra.mxu0 0.0
    %670 = vmatpush.msra.mxu0 0.0
    %671 = vmatpush.msra.mxu0 0.0
    %672 = vmatpush.msra.mxu0 0.0
    %673 = vmatpush.msra.mxu0 0.0
    %674 = vmatpush.msra.mxu0 0.0
    %675 = vmatpush.msra.mxu0 0.0
    %676 = vmatpush.msra.mxu0 0.0
    %677 = vmatpush.msra.mxu0 0.0
    %678 = vmatpush.msra.mxu0 0.0
    %679 = vmatpush.msra.mxu0 0.0
    %680 = vmatpush.msra.mxu0 %v602
    %681 = vmatpush.msra.mxu0 %v598
    %682 = vmatpush.msra.mxu0 %v594
    %683 = vmatpush.msra.mxu0 %v590
    %684 = vmatmul.f32.gmra.mxu0 %v606
    %v685 = vpop.f32.mrf.mxu0
    %v686 = vadd.f32 0.0, %v685
    %687 = vdwg.mxu0
    %v688 = vld [vmem:[%s3] sm:$0xff]
    %v689 = vld [vmem:[%s3 + $0x8] sm:$0xff]
    %v690 = vld [vmem:[%s3 + $0x10] sm:$0xff]
    %v691 = vld [vmem:[%s3 + $0x18] sm:$0xff]
    %v692 = vld [vmem:[%s3 + $0x20] sm:$0xff]
    %v693 = vld [vmem:[%s3 + $0x28] sm:$0xff]
    %v694 = vld [vmem:[%s3 + $0x30] sm:$0xff]
    %v695 = vld [vmem:[%s3 + $0x38] sm:$0xff]
    %v696 = vld [vmem:[%s3 + $0x40] sm:$0xff]
    %v697 = vld [vmem:[%s3 + $0x48] sm:$0xff]
    %v698 = vld [vmem:[%s3 + $0x50] sm:$0xff]
    %v699 = vld [vmem:[%s3 + $0x58] sm:$0xff]
    %v700 = vld [vmem:[%s3 + $0x60] sm:$0xff]
    %v701 = vld [vmem:[%s3 + $0x68] sm:$0xff]
    %v702 = vld [vmem:[%s3 + $0x70] sm:$0xff]
    %v703 = vld [vmem:[%s3 + $0x78] sm:$0xff]
    %v704 = vld [vmem:[%s3 + $0x80] sm:$0xff]
    %v705 = vld [vmem:[%s3 + $0x88] sm:$0xff]
    %v706 = vld [vmem:[%s3 + $0x90] sm:$0xff]
    %v707 = vld [vmem:[%s3 + $0x98] sm:$0xff]
    %v708 = vld [vmem:[%s3 + $0xa0] sm:$0xff]
    %v709 = vld [vmem:[%s3 + $0xa8] sm:$0xff]
    %v710 = vld [vmem:[%s3 + $0xb0] sm:$0xff]
    %v711 = vld [vmem:[%s3 + $0xb8] sm:$0xff]
    %v712 = vld [vmem:[%s3 + $0xc0] sm:$0xff]
    %v713 = vld [vmem:[%s3 + $0xc8] sm:$0xff]
    %v714 = vld [vmem:[%s3 + $0xd0] sm:$0xff]
    %v715 = vld [vmem:[%s3 + $0xd8] sm:$0xff]
    %v716 = vld [vmem:[%s3 + $0xe0] sm:$0xff]
    %v717 = vld [vmem:[%s3 + $0xe8] sm:$0xff]
    %v718 = vld [vmem:[%s3 + $0xf0] sm:$0xff]
    %v719 = vld [vmem:[%s3 + $0xf8] sm:$0xff]
    %v720 = vld [vmem:[%s3 + $0x100] sm:$0xff]
    %v721 = vld [vmem:[%s3 + $0x108] sm:$0xff]
    %v722 = vld [vmem:[%s3 + $0x110] sm:$0xff]
    %v723 = vld [vmem:[%s3 + $0x118] sm:$0xff]
    %v724 = vld [vmem:[%s3 + $0x120] sm:$0xff]
    %v725 = vld [vmem:[%s3 + $0x128] sm:$0xff]
    %v726 = vld [vmem:[%s3 + $0x130] sm:$0xff]
    %v727 = vld [vmem:[%s3 + $0x138] sm:$0xff]
    %v728 = vld [vmem:[%s3 + $0x140] sm:$0xff]
    %v729 = vld [vmem:[%s3 + $0x148] sm:$0xff]
    %v730 = vld [vmem:[%s3 + $0x150] sm:$0xff]
    %v731 = vld [vmem:[%s3 + $0x158] sm:$0xff]
    %v732 = vld [vmem:[%s3 + $0x160] sm:$0xff]
    %v733 = vld [vmem:[%s3 + $0x168] sm:$0xff]
    %v734 = vld [vmem:[%s3 + $0x170] sm:$0xff]
    %v735 = vld [vmem:[%s3 + $0x178] sm:$0xff]
    %v736 = vld [vmem:[%s3 + $0x180] sm:$0xff]
    %v737 = vld [vmem:[%s3 + $0x188] sm:$0xff]
    %v738 = vld [vmem:[%s3 + $0x190] sm:$0xff]
    %v739 = vld [vmem:[%s3 + $0x198] sm:$0xff]
    %v740 = vld [vmem:[%s3 + $0x1a0] sm:$0xff]
    %v741 = vld [vmem:[%s3 + $0x1a8] sm:$0xff]
    %v742 = vld [vmem:[%s3 + $0x1b0] sm:$0xff]
    %v743 = vld [vmem:[%s3 + $0x1b8] sm:$0xff]
    %v744 = vld [vmem:[%s3 + $0x1c0] sm:$0xff]
    %v745 = vld [vmem:[%s3 + $0x1c8] sm:$0xff]
    %v746 = vld [vmem:[%s3 + $0x1d0] sm:$0xff]
    %v747 = vld [vmem:[%s3 + $0x1d8] sm:$0xff]
    %v748 = vld [vmem:[%s3 + $0x1e0] sm:$0xff]
    %v749 = vld [vmem:[%s3 + $0x1e8] sm:$0xff]
    %v750 = vld [vmem:[%s3 + $0x1f0] sm:$0xff]
    %v751 = vld [vmem:[%s3 + $0x1f8] sm:$0xff]
    %752 = vmatpush.msra.mxu0 %v703
    %753 = vmatpush.msra.mxu0 %v702
    %754 = vmatpush.msra.mxu0 %v701
    %755 = vmatpush.msra.mxu0 %v700
    %756 = vmatpush.msra.mxu0 %v699
    %757 = vmatpush.msra.mxu0 %v698
    %758 = vmatpush.msra.mxu0 %v697
    %759 = vmatpush.msra.mxu0 %v696
    %760 = vmatpush.msra.mxu0 %v695
    %761 = vmatpush.msra.mxu0 %v694
    %762 = vmatpush.msra.mxu0 %v693
    %763 = vmatpush.msra.mxu0 %v692
    %764 = vmatpush.msra.mxu0 %v691
    %765 = vmatpush.msra.mxu0 %v690
    %766 = vmatpush.msra.mxu0 %v689
    %767 = vmatpush.msra.mxu0 %v688
    %768 = vmatmul.f32.gmra.mxu0 %v626
    %v769 = vpop.f32.mrf.mxu0
    %v770 = vadd.f32 0.0, %v769
    %771 = vdwg.mxu0
    %772 = vmatpush.msra.mxu0 %v719
    %773 = vmatpush.msra.mxu0 %v718
    %774 = vmatpush.msra.mxu0 %v717
    %775 = vmatpush.msra.mxu0 %v716
    %776 = vmatpush.msra.mxu0 %v715
    %777 = vmatpush.msra.mxu0 %v714
    %778 = vmatpush.msra.mxu0 %v713
    %779 = vmatpush.msra.mxu0 %v712
    %780 = vmatpush.msra.mxu0 %v711
    %781 = vmatpush.msra.mxu0 %v710
    %782 = vmatpush.msra.mxu0 %v709
    %783 = vmatpush.msra.mxu0 %v708
    %784 = vmatpush.msra.mxu0 %v707
    %785 = vmatpush.msra.mxu0 %v706
    %786 = vmatpush.msra.mxu0 %v705
    %787 = vmatpush.msra.mxu0 %v704
    %788 = vmatmul.f32.gmra.mxu0 %v646
    %v789 = vpop.f32.mrf.mxu0
    %v790 = vadd.f32 %v770, %v789
    %791 = vdwg.mxu0
    %792 = vmatpush.msra.mxu0 %v735
    %793 = vmatpush.msra.mxu0 %v734
    %794 = vmatpush.msra.mxu0 %v733
    %795 = vmatpush.msra.mxu0 %v732
    %796 = vmatpush.msra.mxu0 %v731
    %797 = vmatpush.msra.mxu0 %v730
    %798 = vmatpush.msra.mxu0 %v729
    %799 = vmatpush.msra.mxu0 %v728
    %800 = vmatpush.msra.mxu0 %v727
    %801 = vmatpush.msra.mxu0 %v726
    %802 = vmatpush.msra.mxu0 %v725
    %803 = vmatpush.msra.mxu0 %v724
    %804 = vmatpush.msra.mxu0 %v723
    %805 = vmatpush.msra.mxu0 %v722
    %806 = vmatpush.msra.mxu0 %v721
    %807 = vmatpush.msra.mxu0 %v720
    %808 = vmatmul.f32.gmra.mxu0 %v666
    %v809 = vpop.f32.mrf.mxu0
    %v810 = vadd.f32 %v790, %v809
    %811 = vdwg.mxu0
    %812 = vmatpush.msra.mxu0 %v751
    %813 = vmatpush.msra.mxu0 %v750
    %814 = vmatpush.msra.mxu0 %v749
    %815 = vmatpush.msra.mxu0 %v748
    %816 = vmatpush.msra.mxu0 %v747
    %817 = vmatpush.msra.mxu0 %v746
    %818 = vmatpush.msra.mxu0 %v745
    %819 = vmatpush.msra.mxu0 %v744
    %820 = vmatpush.msra.mxu0 %v743
    %821 = vmatpush.msra.mxu0 %v742
    %822 = vmatpush.msra.mxu0 %v741
    %823 = vmatpush.msra.mxu0 %v740
    %824 = vmatpush.msra.mxu0 %v739
    %825 = vmatpush.msra.mxu0 %v738
    %826 = vmatpush.msra.mxu0 %v737
    %827 = vmatpush.msra.mxu0 %v736
    %828 = vmatmul.f32.gmra.mxu0 %v686
    %v829 = vpop.f32.mrf.mxu0
    %v830 = vadd.f32 %v810, %v829
    %831 = vdwg.mxu0
    %832 = vst [vmem:[#allocation2] sm:$0x3] %v830
    %v833 = vld [vmem:[%s4] sm:$0xff]
    %v834 = vld [vmem:[%s4 + $0x8] sm:$0xff]
    %v835 = vld [vmem:[%s4 + $0x10] sm:$0xff]
    %v836 = vld [vmem:[%s4 + $0x18] sm:$0xff]
    %v837 = vld [vmem:[%s4 + $0x20] sm:$0xff]
    %v838 = vld [vmem:[%s4 + $0x28] sm:$0xff]
    %v839 = vld [vmem:[%s4 + $0x30] sm:$0xff]
    %v840 = vld [vmem:[%s4 + $0x38] sm:$0xff]
    %v841 = vld [vmem:[%s4 + $0x40] sm:$0xff]
    %v842 = vld [vmem:[%s4 + $0x48] sm:$0xff]
    %v843 = vld [vmem:[%s4 + $0x50] sm:$0xff]
    %v844 = vld [vmem:[%s4 + $0x58] sm:$0xff]
    %v845 = vld [vmem:[%s4 + $0x60] sm:$0xff]
    %v846 = vld [vmem:[%s4 + $0x68] sm:$0xff]
    %v847 = vld [vmem:[%s4 + $0x70] sm:$0xff]
    %v848 = vld [vmem:[%s4 + $0x78] sm:$0xff]
    %v849 = vld [vmem:[%s5] sm:$0x1]
    %v851 = vperm.slane %v849, 0
    %853 = vmatpush.msra.mxu0 %v848
    %854 = vmatpush.msra.mxu0 %v847
    %855 = vmatpush.msra.mxu0 %v846
    %856 = vmatpush.msra.mxu0 %v845
    %857 = vmatpush.msra.mxu0 %v844
    %858 = vmatpush.msra.mxu0 %v843
    %859 = vmatpush.msra.mxu0 %v842
    %860 = vmatpush.msra.mxu0 %v841
    %861 = vmatpush.msra.mxu0 %v840
    %862 = vmatpush.msra.mxu0 %v839
    %863 = vmatpush.msra.mxu0 %v838
    %864 = vmatpush.msra.mxu0 %v837
    %865 = vmatpush.msra.mxu0 %v836
    %866 = vmatpush.msra.mxu0 %v835
    %867 = vmatpush.msra.mxu0 %v834
    %868 = vmatpush.msra.mxu0 %v833
    %869 = vmatmul.f32.gmra.mxu0 %v830
    %v870 = vpop.f32.mrf.mxu0
    %v871 = vadd.f32 %v851, %v870
    %872 = vdwg.mxu0
    %873 = vst [vmem:[#allocation4] sm:$0x3] %v871
    // Predicated region
    $region26: #{transferred_network_m.1} parent=1 // pred_check
      _
    $region27: #{transferred_network_m.1} parent=1 // pred_check_branch
      %875 = sbr.rel (0) target = $region29
    $region28: #{transferred_network_m.1} parent=1 // pred_region
      %877 = vsyncadd [#allocation3], 0
      %s879 = sshll.u32 [#allocation2], 4
      %s880 = int_to_ptr.vmem [resolvable:$true] %s879
      %s881 = sshll.u32 %s6, 4
      %s882 = int_to_ptr.hbm [resolvable:$true] %s881
      %884 = dma.vmem_to_hbm [thread:$0]  %s880, 32, %s882, [#allocation3]
    $region29: #{transferred_network_m.1} parent=1 // pred_fallthru
      _
    // Predicated region
    $region30: #{transferred_network_m.1} parent=1 // pred_check
      _
    $region31: #{transferred_network_m.1} parent=1 // pred_check_branch
      %886 = sbr.rel (0) target = $region33
    $region32: #{transferred_network_m.1} parent=1 // pred_region
      %888 = vsyncadd [#allocation5], 0
      %s890 = sshll.u32 [#allocation4], 4
      %s891 = int_to_ptr.vmem [resolvable:$true] %s890
      %s892 = sshll.u32 %s7, 4
      %s893 = int_to_ptr.hbm [resolvable:$true] %s892
      %895 = dma.vmem_to_hbm [thread:$0]  %s891, 32, %s893, [#allocation5]
    $region33: #{transferred_network_m.1} parent=1 // pred_fallthru
      _
    // Predicated region
    $region34: #{transferred_network_m.1} parent=1 // pred_check
      _
    $region35: #{transferred_network_m.1} parent=1 // pred_check_branch
      %897 = sbr.rel (0) target = $region37
    $region36: #{transferred_network_m.1} parent=1 // pred_region
      %899 = dma.done [#allocation3], 32
    $region37: #{transferred_network_m.1} parent=1 // pred_fallthru
      _
    // Predicated region
    $region38: #{transferred_network_m.1} parent=1 // pred_check
      _
    $region39: #{transferred_network_m.1} parent=1 // pred_check_branch
      %901 = sbr.rel (0) target = $region41
    $region40: #{transferred_network_m.1} parent=1 // pred_region
      %903 = dma.done [#allocation5], 32
    $region41: #{transferred_network_m.1} parent=1 // pred_fallthru
      _
    %904 = vsyncpa [#allocation3], 1
    %905 = vsyncpa [#allocation5], 1

</llo_original>
